<compile_context>
chip_gen: v5e
topology: v5e:2x2
jax: 0.10.0
libtpu: 0.0.40
codegen_flags: <defaults>
</compile_context>

<pallas_src>
import numpy as np
import jax
import jax.numpy as jnp
from jax import lax
from jax.experimental import pallas as pl
from jax.experimental.pallas import tpu as pltpu


# ---------------------------------------------------------------------------
# Host-side helpers (parameter / operator construction, no data passes).
# ---------------------------------------------------------------------------
def _round_up(n, m):
    return (n + m - 1) // m * m


def _interp_matrix(L):
    """(L, 2L) matrix A such that h = x @ A reproduces
    F.interpolate(scale_factor=2, mode='linear', align_corners=False)."""
    j = np.arange(2 * L)
    src = np.maximum((j + 0.5) * 0.5 - 0.5, 0.0)
    i0 = np.floor(src).astype(np.int64)
    i1 = np.minimum(i0 + 1, L - 1)
    lam = (src - i0).astype(np.float32)
    A = np.zeros((L, 2 * L), np.float32)
    A[i0, j] += 1.0 - lam          # (i0[j], j) pairs are unique across j
    A[i1, j] += lam                # edge columns (i0 == i1) sum to 1.0
    return A


def _shifted_interp_matrix(A, delta, m_out):
    """(L, m_out) matrix A_d with (x @ A_d)[:, m] = h[:, m + delta]; zero
    outside [0, 2L) (matches conv zero padding).  Pad columns (>= 2L) are 0."""
    L, two_l = A.shape
    out = np.zeros((L, m_out), np.float32)
    m = np.arange(m_out)
    s = m + delta
    valid = (m < two_l) & (s >= 0) & (s < two_l)
    out[:, m[valid]] = A[:, s[valid]]
    return out


def _pick_batch_block(B, bytes_per_batch, target_bytes=2 << 20):
    """Largest divisor of B whose per-step HBM traffic stays under
    target_bytes, preferring >= 2 grid steps (v7x has 2 TensorCores)."""
    divisors = [d for d in range(1, B + 1) if B % d == 0]
    cands = [d for d in divisors if B // d >= 2] or divisors
    fitting = [d for d in cands if d * bytes_per_batch <= target_bytes]
    return max(fitting) if fitting else min(cands)


# ---------------------------------------------------------------------------
# Kernel 1: fused 2x linear upsample (with_conv=False).
#   One MXU matmul per grid step: (Bblk*C, L) @ (L, M).
# ---------------------------------------------------------------------------
def _upsample2x_kernel(x_ref, a_ref, o_ref):
    bblk, C, L = x_ref.shape
    M = o_ref.shape[-1]
    x2 = x_ref[...].reshape(bblk * C, L).astype(jnp.float32)   # free when C%8==0
    h = jnp.dot(x2, a_ref[...], preferred_element_type=jnp.float32)
    o_ref[...] = h.reshape(bblk, C, M).astype(o_ref.dtype)


# ---------------------------------------------------------------------------
# Kernel 2: fused 2x linear upsample + conv1d(k=3, pad=1) + bias.
#   Stage 1: ONE matmul against [A_{-1}|A_0|A_{+1}]  -> (Bblk*C, 3M).
#   Stage 2: per batch, three accumulating (O,C)x(C,M) matmuls (no h3 concat),
#            then a single broadcast bias add.
# ---------------------------------------------------------------------------
def _upsample2x_conv3_kernel(x_ref, a3_ref, w_ref, b_ref, o_ref):
    bblk, C, L = x_ref.shape
    _, O, M = o_ref.shape
    x2 = x_ref[...].reshape(bblk * C, L).astype(jnp.float32)
    # interp + the three conv-tap shifts in one MXU matmul (N = 3*M lanes).
    h_all = jnp.dot(x2, a3_ref[...], preferred_element_type=jnp.float32)
    w = w_ref[...].astype(jnp.float32)        # (3, O, C) conv taps
    bias = b_ref[...].astype(jnp.float32)     # (O, 1)
    for b in range(bblk):                     # unrolled at trace time
        rows = slice(b * C, (b + 1) * C)      # 128-lane / 8-sublane aligned slices
        acc = jnp.dot(w[0], h_all[rows, 0 * M:1 * M],
                      preferred_element_type=jnp.float32)
        acc = acc + jnp.dot(w[1], h_all[rows, 1 * M:2 * M],
                            preferred_element_type=jnp.float32)
        acc = acc + jnp.dot(w[2], h_all[rows, 2 * M:3 * M],
                            preferred_element_type=jnp.float32)
        o_ref[b] = (acc + bias).astype(o_ref.dtype)


# ---------------------------------------------------------------------------
# Wrapper: operator/parameter layout only, no data passes over x.
# ---------------------------------------------------------------------------
def upsample_forward(x, weight=None, bias=None, *, with_conv=False):
    B, C, L = x.shape
    M_true = 2 * L
    M = _round_up(M_true, 128)          # lane-dense (unmasked) output stores
    A = _interp_matrix(L)

    if not with_conv:
        a0 = jnp.asarray(_shifted_interp_matrix(A, 0, M))        # (L, M)
        bblk = _pick_batch_block(B, (C * L + C * M) * x.dtype.itemsize)
        out = pl.pallas_call(
            _upsample2x_kernel,
            out_shape=jax.ShapeDtypeStruct((B, C, M), x.dtype),
            grid=(B // bblk,),
            in_specs=[
                pl.BlockSpec((bblk, C, L), lambda b: (b, 0, 0)),
                pl.BlockSpec((L, M), lambda b: (0, 0)),          # resident operator
            ],
            out_specs=pl.BlockSpec((bblk, C, M), lambda b: (b, 0, 0)),
            compiler_params=pltpu.CompilerParams(
                dimension_semantics=("parallel",)),
        )(x, a0)
        return out if M == M_true else out[:, :, :M_true]

    O = weight.shape[0]
    # [A_{-1} | A_0 | A_{+1}] stacked along lanes -> one stage-1 matmul.
    a3 = jnp.asarray(np.concatenate(
        [_shifted_interp_matrix(A, d, M) for d in (-1, 0, 1)], axis=1))  # (L, 3M)
    w_stack = jnp.transpose(weight, (2, 0, 1)).astype(jnp.float32)       # (3, O, C)
    b_col = bias.reshape(O, 1).astype(jnp.float32)
    bblk = _pick_batch_block(B, (C * L + O * M) * x.dtype.itemsize)
    out = pl.pallas_call(
        _upsample2x_conv3_kernel,
        out_shape=jax.ShapeDtypeStruct((B, O, M), x.dtype),
        grid=(B // bblk,),
        in_specs=[
            pl.BlockSpec((bblk, C, L), lambda b: (b, 0, 0)),
            pl.BlockSpec((L, 3 * M), lambda b: (0, 0)),          # resident operator
            pl.BlockSpec((3, O, C), lambda b: (0, 0, 0)),        # resident weights
            pl.BlockSpec((O, 1), lambda b: (0, 0)),              # resident bias
        ],
        out_specs=pl.BlockSpec((bblk, O, M), lambda b: (b, 0, 0)),
        compiler_params=pltpu.CompilerParams(
            dimension_semantics=("parallel",)),
    )(x, a3, w_stack, b_col)
    return out if M == M_true else out[:, :, :M_true]


# ---------------------------------------------------------------------------
# Pure-JAX reference (mirrors the PyTorch forward) for a correctness check.
# ---------------------------------------------------------------------------
def _ref_forward(x, w, b, with_conv):
    B, C, L = x.shape
    j = jnp.arange(2 * L)
    src = jnp.maximum((j + 0.5) * 0.5 - 0.5, 0.0)
    i0 = jnp.floor(src).astype(jnp.int32)
    i1 = jnp.minimum(i0 + 1, L - 1)
    lam = src - i0
    h = x[:, :, i0] * (1.0 - lam) + x[:, :, i1] * lam
    if with_conv:
        h = jax.lax.conv_general_dilated(
            h, w, window_strides=(1,), padding=((1, 1),),
            dimension_numbers=('NCH', 'OIH', 'NCH'),
            precision=jax.lax.Precision.HIGHEST)
        h = h + b[None, :, None]
    return h


if __name__ == "__main__":
    key = jax.random.PRNGKey(0)
    B, C, L = 2, 8, 128
    out_ch = C  # Upsample(in_ch=C, out_ch=None) -> out_ch = in_ch

    kx, kw, kb = jax.random.split(key, 3)
    x = jax.random.normal(kx, (B, C, L), dtype=jnp.float32)

    # conv3x3 params: default_initializer() == variance_scaling(1., 'fan_avg', 'uniform')
    fan_in, fan_out = C * 3, out_ch * 3
    variance = 1.0 / ((fan_in + fan_out) / 2.0)
    weight = ((jax.random.uniform(kw, (out_ch, C, 3), jnp.float32) * 2.0 - 1.0)
              * np.sqrt(3.0 * variance))
    # bias is zero-initialized in the module; use a nonzero one to exercise the
    # fused bias path (forward semantics are parameter-agnostic).
    bias = 0.1 * jax.random.normal(kb, (out_ch,), jnp.float32)

    # fir=False, with_conv=False
    h0 = jax.block_until_ready(upsample_forward(x, with_conv=False))
    # fir=False, with_conv=True
    h1 = jax.block_until_ready(upsample_forward(x, weight, bias, with_conv=True))

    assert h0.shape == (B, C, 2 * L)
    assert h1.shape == (B, out_ch, 2 * L)

    r0 = _ref_forward(x, weight, bias, with_conv=False)
    r1 = _ref_forward(x, weight, bias, with_conv=True)
    np.testing.assert_allclose(np.asarray(h0), np.asarray(r0), rtol=1e-5, atol=1e-5)
    np.testing.assert_allclose(np.asarray(h1), np.asarray(r1), rtol=1e-5, atol=1e-5)

    print("KERNEL_OK")
</pallas_src>

<mosaic_0001>
module attributes {stable_mosaic.version = 11 : i64} {
  func.func @_upsample2x_kernel(%arg0: i32, %arg1: memref<1x8x128xf32, #tpu.memory_space<vmem>>, %arg2: memref<128x256xf32, #tpu.memory_space<vmem>>, %arg3: memref<1x8x256xf32, #tpu.memory_space<vmem>>) attributes {dimension_semantics = [#tpu.dimension_semantics<parallel>], iteration_bounds = array<i64: 2>, scalar_prefetch = 0 : i64, scratch_operands = 0 : i64, tpu.core_type = #tpu.core_type<tc>, window_params = [{transform_indices = @transform_0, window_bounds = array<i64: 1, 8, 128>}, {pipeline_mode = #tpu.pipeline_mode<synchronous>, transform_indices = @transform_1, window_bounds = array<i64: 128, 256>}, {transform_indices = @transform_2, window_bounds = array<i64: 1, 8, 256>}]} {
    %c0 = arith.constant 0 : index
    %c0_0 = arith.constant 0 : index
    %c0_1 = arith.constant 0 : index
    %0 = vector.load %arg1[%c0, %c0_0, %c0_1] : memref<1x8x128xf32, #tpu.memory_space<vmem>>, vector<1x8x128xf32>
    %1 = vector.shape_cast %0 : vector<1x8x128xf32> to vector<8x128xf32>
    %c0_2 = arith.constant 0 : index
    %c0_3 = arith.constant 0 : index
    %2 = vector.load %arg2[%c0_2, %c0_3] : memref<128x256xf32, #tpu.memory_space<vmem>>, vector<128x256xf32>
    %cst = arith.constant dense<0.000000e+00> : vector<8x256xf32>
    %3 = tpu.matmul %1, %2, %cst {dimension_numbers = #tpu.dot_dimension_numbers<[1], [0], [0], [1], [0, 0, 1, 1], [], []>} : vector<8x128xf32>, vector<128x256xf32>, vector<8x256xf32> -> vector<8x256xf32>
    %4 = vector.shape_cast %3 : vector<8x256xf32> to vector<1x8x256xf32>
    %c0_4 = arith.constant 0 : index
    %c0_5 = arith.constant 0 : index
    %c0_6 = arith.constant 0 : index
    %5 = vector.load %arg3[%c0_4, %c0_5, %c0_6] : memref<1x8x256xf32, #tpu.memory_space<vmem>>, vector<1x8x256xf32>
    tpu.vector_store %arg3[%c0_4, %c0_5, %c0_6], %4 {strides = array<i32>} : memref<1x8x256xf32, #tpu.memory_space<vmem>>, vector<1x8x256xf32>,
    return
  }
  func.func @transform_0(%arg0: i32) -> (i32, i32, i32) {
    %c0_i32 = arith.constant 0 : i32
    %c0_i32_0 = arith.constant 0 : i32
    %c0_i32_1 = arith.constant 0 : i32
    return %arg0, %c0_i32, %c0_i32_0 : i32, i32, i32
  }
  func.func @transform_1(%arg0: i32) -> (i32, i32) {
    %c0_i32 = arith.constant 0 : i32
    %c0_i32_0 = arith.constant 0 : i32
    %c0_i32_1 = arith.constant 0 : i32
    return %c0_i32, %c0_i32_0 : i32, i32
  }
  func.func @transform_2(%arg0: i32) -> (i32, i32, i32) {
    %c0_i32 = arith.constant 0 : i32
    %c0_i32_0 = arith.constant 0 : i32
    %c0_i32_1 = arith.constant 0 : i32
    return %arg0, %c0_i32, %c0_i32_0 : i32, i32, i32
  }
}

</mosaic_0001>

<llo_original>
// kernel: tpu_custom_call.1
$region0: #{tpu_custom_call.1}
  #allocation0 [shape = 'u32[]', space=smem, size = 0x4, offset = 0x4, fixed_abs, tag = 'smem constant byte address 0x4 - core index']
  #allocation1 [shape = 'u32[72,128]{1,0:T(1,128)}', space=vmem, size = 0x9000, scoped, tag = 'internal scratch']
  %s0 = inlined_call_operand.hbm [shape: f32[2,8,128], index: 0, kind: input, shape index: {}]
  %s1 = inlined_call_operand.hbm [shape: f32[128,256], index: 1, kind: input, shape index: {}]
  %s2 = inlined_call_operand.hbm [shape: f32[2,8,256], index: 2, kind: output, shape index: {}]
  %s3 = sld [smem:[#allocation0]]
  $region49: #{tpu_custom_call.1} parent=0
    _
  %s5 = ssub.s32 1, %s3
  %s6 = scalar_select 0, %s5, %s3
  $region1: #{tpu_custom_call.1} parent=0
    #allocation2 [shape = 'u8[8192]{0}', space=vmem, size = 0x2000, scoped, tag = 'input window, operand 0']
    #allocation3 [shape = 's32[2]{0}', space=sflag, size = 0x8, scoped, tag = 'scoped memory for tpu_custom_call.1']
    #allocation4 [shape = 's32[2]{0}', space=sflag, size = 0x8, scoped, tag = 'scoped memory for tpu_custom_call.1']
    #allocation5 [shape = 'u8[131072]{0}', space=vmem, size = 0x20000, scoped, tag = 'input window, operand 1, single buffered']
    #allocation6 [shape = 's32[1]{0}', space=sflag, size = 0x4, scoped, tag = 'scoped memory for tpu_custom_call.1']
    #allocation7 [shape = 'u8[16384]{0}', space=vmem, size = 0x4000, scoped, tag = 'output window, operand 0']
    %7 = vsyncpa [#allocation3], 0
    %s8 = scalar_lea.sflag [#allocation3], 1
    %9 = vsyncpa %s8, 0
    %10 = vsyncpa [#allocation6], 0
    %11 = vsyncpa [#allocation4], 0
    %s12 = scalar_lea.sflag [#allocation4], 1
    %13 = vsyncpa %s12, 0
    loop: start=0, step=1, limit=4
    $region2: #{tpu_custom_call.1} parent=1 // loop_pre_header
      _
    $region3: #{tpu_custom_call.1} parent=1 // loop_header
      %s15 = sphi 0, %s19
      %p16 = scmp.ge.s32.totalorder %s15, 4
      %s25 = sphi 0, %s27
      %s28 = sphi 0, %s25
      %s29 = sphi 0, %s28
      %s45 = sphi 0, %s29
      %s49 = sphi 0, %s49
      %s51 = sphi 0, %s49
      %s52 = sphi 0, %s51
      %s66 = sphi 0, %s52
      %s72 = sphi 0, %s74
      %s75 = sphi 0, %s72
      %s76 = sphi 0, %s75
      %s92 = sphi 0, %s76
    $region4: #{tpu_custom_call.1} parent=1 // loop_header_branch
      %18 = sbr.rel (%p16) target = $region8
    $region5: #{tpu_custom_call.1} parent=1 // loop_body
      %s20 = ssub.s32 %s15, 1
      %s21 = ssub.s32 %s15, 2
      %s22 = sadd.s32 %s15, 1
      %s23 = ssub.s32 %s15, %s22
      %p24 = scmp.eq.s32.totalorder %s23, 0
      %s26 = sadd.s32 %s25, 1
      %s27 = scalar_select %p24, %s25, %s26
      %p30 = pneg %p24
      %p31 = scmp.eq.s32.totalorder %s15, 1
      %p32 = por %p30, %p31
      %p33 = scmp.ne.s32.totalorder %s25, %s28
      %p34 = scmp.eq.s32.totalorder %s15, 0
      %p35 = por %p33, %p34
      %p36 = scmp.ne.s32.totalorder %s25, %s28
      %p37 = scmp.eq.s32.totalorder %s20, 1
      %p38 = por %p36, %p37
      %p39 = scmp.ne.s32.totalorder %s28, %s29
      %p40 = scmp.eq.s32.totalorder %s20, 0
      %p41 = por %p39, %p40
      %p42 = scmp.ne.s32.totalorder %s28, %s29
      %p43 = scmp.eq.s32.totalorder %s21, 1
      %p44 = por %p42, %p43
      %p46 = scmp.ne.s32.totalorder %s29, %s45
      %p47 = scmp.eq.s32.totalorder %s21, 0
      %p48 = por %p46, %p47
      %s50 = sadd.s32 %s49, 1
      %p53 = scmp.eq.s32.totalorder %s15, 1
      %p54 = scmp.ne.s32.totalorder %s49, %s51
      %p55 = scmp.eq.s32.totalorder %s15, 0
      %p56 = por %p54, %p55
      %p57 = scmp.ne.s32.totalorder %s49, %s51
      %p58 = scmp.eq.s32.totalorder %s20, 1
      %p59 = por %p57, %p58
      %p60 = scmp.ne.s32.totalorder %s51, %s52
      %p61 = scmp.eq.s32.totalorder %s20, 0
      %p62 = por %p60, %p61
      %p63 = scmp.ne.s32.totalorder %s51, %s52
      %p64 = scmp.eq.s32.totalorder %s21, 1
      %p65 = por %p63, %p64
      %p67 = scmp.ne.s32.totalorder %s52, %s66
      %p68 = scmp.eq.s32.totalorder %s21, 0
      %p69 = por %p67, %p68
      %s70 = ssub.s32 %s15, %s22
      %p71 = scmp.eq.s32.totalorder %s70, 0
      %s73 = sadd.s32 %s72, 1
      %s74 = scalar_select %p71, %s72, %s73
      %p77 = pneg %p71
      %p78 = scmp.eq.s32.totalorder %s15, 1
      %p79 = por %p77, %p78
      %p80 = scmp.ne.s32.totalorder %s72, %s75
      %p81 = scmp.eq.s32.totalorder %s15, 0
      %p82 = por %p80, %p81
      %p83 = scmp.ne.s32.totalorder %s72, %s75
      %p84 = scmp.eq.s32.totalorder %s20, 1
      %p85 = por %p83, %p84
      %p86 = scmp.ne.s32.totalorder %s75, %s76
      %p87 = scmp.eq.s32.totalorder %s20, 0
      %p88 = por %p86, %p87
      %p89 = scmp.ne.s32.totalorder %s75, %s76
      %p90 = scmp.eq.s32.totalorder %s21, 1
      %p91 = por %p89, %p90
      %p93 = scmp.ne.s32.totalorder %s76, %s92
      %p94 = scmp.eq.s32.totalorder %s21, 0
      %p95 = por %p93, %p94
      %p96 = scmp.le.s32.totalorder 1, %s15
      %p97 = scmp.lt.s32.totalorder %s15, 3
      %p98 = pnand %p96, %p97
      %p99 = pneg %p98
      // Predicated region
      $region9: #{tpu_custom_call.1} parent=5 // pred_check
        _
      $region10: #{tpu_custom_call.1} parent=5 // pred_check_branch
        %101 = sbr.rel (%p98) target = $region12
      $region11: #{tpu_custom_call.1} parent=5 // pred_region
        %s102 = ssub.s32 %s15, 1
        // Predicated region
        $region13: #{tpu_custom_call.1} parent=11 // pred_check
          %p103 = pneg %p62
        $region14: #{tpu_custom_call.1} parent=11 // pred_check_branch
          %105 = sbr.rel (%p103) target = $region16
        $region15: #{tpu_custom_call.1} parent=11 // pred_region
          %107 = vsyncadd [#allocation6], 0
          %s108 = sshll.u32 %s1, 4
          %s109 = int_to_ptr.hbm [resolvable:$true] %s108
          %s110 = sshll.u32 [#allocation5], 4
          %s111 = int_to_ptr.vmem [resolvable:$true] %s110
          %116 = dma.hbm_to_vmem [thread:$0]  %s109, 4096, %s111, [#allocation6], 256, 256, 16
        $region16: #{tpu_custom_call.1} parent=11 // pred_fallthru
          _
      $region12: #{tpu_custom_call.1} parent=5 // pred_fallthru
        _
      %p117 = scmp.lt.s32.totalorder %s15, 2
      // Predicated region
      $region17: #{tpu_custom_call.1} parent=5 // pred_check
        %p118 = pneg %p117
      $region18: #{tpu_custom_call.1} parent=5 // pred_check_branch
        %120 = sbr.rel (%p118) target = $region20
      $region19: #{tpu_custom_call.1} parent=5 // pred_region
        // Predicated region
        $region21: #{tpu_custom_call.1} parent=19 // pred_check
          %p121 = pneg %p35
        $region22: #{tpu_custom_call.1} parent=19 // pred_check_branch
          %123 = sbr.rel (%p121) target = $region24
        $region23: #{tpu_custom_call.1} parent=19 // pred_region
          %s124 = sand.u32 %s25, 1
          %s125 = scalar_lea.sflag [#allocation3], %s124
          %s126 = sand.u32 %s25, 1
          %s127 = smul.addr %s126, 8
          %s128 = scalar_lea.vmem [#allocation2], %s127
          %130 = vsyncadd %s125, 0
          %s131 = smul.addr %s15, 8
          %s132 = scalar_lea.hbm %s0, %s131
          %s134 = sshll.u32 %s132, 4
          %s135 = int_to_ptr.hbm [resolvable:$true] %s134
          %s136 = sshll.u32 %s128, 4
          %s137 = int_to_ptr.vmem [resolvable:$true] %s136
          %139 = dma.hbm_to_vmem [thread:$0]  %s135, 128, %s137, %s125
        $region24: #{tpu_custom_call.1} parent=19 // pred_fallthru
          _
      $region20: #{tpu_custom_call.1} parent=5 // pred_fallthru
        _
      %p140 = scmp.le.s32.totalorder 1, %s15
      %p141 = scmp.lt.s32.totalorder %s15, 3
      %p142 = pnand %p140, %p141
      %p143 = pneg %p142
      // Predicated region
      $region25: #{tpu_custom_call.1} parent=5 // pred_check
        _
      $region26: #{tpu_custom_call.1} parent=5 // pred_check_branch
        %145 = sbr.rel (%p142) target = $region28
      $region27: #{tpu_custom_call.1} parent=5 // pred_region
        %s146 = ssub.s32 %s15, 1
        %s147 = sand.u32 %s28, 1
        %s148 = scalar_lea.sflag [#allocation3], %s147
        %s149 = sand.u32 %s28, 1
        %s150 = smul.addr %s149, 8
        %s151 = scalar_lea.vmem [#allocation2], %s150
        // Predicated region
        $region29: #{tpu_custom_call.1} parent=27 // pred_check
          %p152 = pneg %p41
        $region30: #{tpu_custom_call.1} parent=27 // pred_check_branch
          %154 = sbr.rel (%p152) target = $region32
        $region31: #{tpu_custom_call.1} parent=27 // pred_region
          %156 = dma.done %s148, 128
        $region32: #{tpu_custom_call.1} parent=27 // pred_fallthru
          _
        // Predicated region
        $region33: #{tpu_custom_call.1} parent=27 // pred_check
          %p157 = pneg %p62
        $region34: #{tpu_custom_call.1} parent=27 // pred_check_branch
          %159 = sbr.rel (%p157) target = $region36
        $region35: #{tpu_custom_call.1} parent=27 // pred_region
          %161 = dma.done [#allocation6], 4096
        $region36: #{tpu_custom_call.1} parent=27 // pred_fallthru
          _
        %s162 = sand.u32 %s28, 1
        %s163 = scalar_lea.sflag [#allocation3], %s162
        %s164 = sand.u32 %s28, 1
        %s165 = smul.addr %s164, 8
        %s166 = scalar_lea.vmem [#allocation2], %s165
        %p167 = pneg %p41
        %p168 = pneg %p38
        %p169 = pneg %p62
        %p170 = pneg %p59
        %p171 = pneg %p88
        %p172 = pneg %p85
        %s173 = sand.u32 %s75, 1
        %s174 = scalar_lea.sflag [#allocation4], %s173
        %s175 = sand.u32 %s75, 1
        %s176 = smul.addr %s175, 16
        %s177 = scalar_lea.vmem [#allocation7], %s176
        %v178 = vld [vmem:[%s151] sm:$0xff]
        %v179 = vld [vmem:[#allocation5] sm:$0xff]
        %v180 = vld [vmem:[#allocation5 + $0x8] sm:$0xff]
        %v181 = vld [vmem:[#allocation5 + $0x10] sm:$0xff]
        %v182 = vld [vmem:[#allocation5 + $0x18] sm:$0xff]
        %v183 = vld [vmem:[#allocation5 + $0x20] sm:$0xff]
        %v184 = vld [vmem:[#allocation5 + $0x28] sm:$0xff]
        %v185 = vld [vmem:[#allocation5 + $0x30] sm:$0xff]
        %v186 = vld [vmem:[#allocation5 + $0x38] sm:$0xff]
        %v187 = vld [vmem:[#allocation5 + $0x40] sm:$0xff]
        %v188 = vld [vmem:[#allocation5 + $0x48] sm:$0xff]
        %v189 = vld [vmem:[#allocation5 + $0x50] sm:$0xff]
        %v190 = vld [vmem:[#allocation5 + $0x58] sm:$0xff]
        %v191 = vld [vmem:[#allocation5 + $0x60] sm:$0xff]
        %v192 = vld [vmem:[#allocation5 + $0x68] sm:$0xff]
        %v193 = vld [vmem:[#allocation5 + $0x70] sm:$0xff]
        %v194 = vld [vmem:[#allocation5 + $0x78] sm:$0xff]
        %v195 = vld [vmem:[#allocation5 + $0x80] sm:$0xff]
        %v196 = vld [vmem:[#allocation5 + $0x88] sm:$0xff]
        %v197 = vld [vmem:[#allocation5 + $0x90] sm:$0xff]
        %v198 = vld [vmem:[#allocation5 + $0x98] sm:$0xff]
        %v199 = vld [vmem:[#allocation5 + $0xa0] sm:$0xff]
        %v200 = vld [vmem:[#allocation5 + $0xa8] sm:$0xff]
        %v201 = vld [vmem:[#allocation5 + $0xb0] sm:$0xff]
        %v202 = vld [vmem:[#allocation5 + $0xb8] sm:$0xff]
        %v203 = vld [vmem:[#allocation5 + $0xc0] sm:$0xff]
        %v204 = vld [vmem:[#allocation5 + $0xc8] sm:$0xff]
        %v205 = vld [vmem:[#allocation5 + $0xd0] sm:$0xff]
        %v206 = vld [vmem:[#allocation5 + $0xd8] sm:$0xff]
        %v207 = vld [vmem:[#allocation5 + $0xe0] sm:$0xff]
        %v208 = vld [vmem:[#allocation5 + $0xe8] sm:$0xff]
        %v209 = vld [vmem:[#allocation5 + $0xf0] sm:$0xff]
        %v210 = vld [vmem:[#allocation5 + $0xf8] sm:$0xff]
        %211 = vmatpush.msra.mxu0 %v209
        %212 = vmatpush.msra.mxu0 %v207
        %213 = vmatpush.msra.mxu0 %v205
        %214 = vmatpush.msra.mxu0 %v203
        %215 = vmatpush.msra.mxu0 %v201
        %216 = vmatpush.msra.mxu0 %v199
        %217 = vmatpush.msra.mxu0 %v197
        %218 = vmatpush.msra.mxu0 %v195
        %219 = vmatpush.msra.mxu0 %v193
        %220 = vmatpush.msra.mxu0 %v191
        %221 = vmatpush.msra.mxu0 %v189
        %222 = vmatpush.msra.mxu0 %v187
        %223 = vmatpush.msra.mxu0 %v185
        %224 = vmatpush.msra.mxu0 %v183
        %225 = vmatpush.msra.mxu0 %v181
        %226 = vmatpush.msra.mxu0 %v179
        %227 = vmatmul.f32.gmra.mxu0 %v178
        %v228 = vpop.f32.mrf.mxu0
        %v229 = vadd.f32 0.0, %v228
        %230 = vdwg.mxu0
        %231 = vmatpush.msra.mxu0 %v210
        %232 = vmatpush.msra.mxu0 %v208
        %233 = vmatpush.msra.mxu0 %v206
        %234 = vmatpush.msra.mxu0 %v204
        %235 = vmatpush.msra.mxu0 %v202
        %236 = vmatpush.msra.mxu0 %v200
        %237 = vmatpush.msra.mxu0 %v198
        %238 = vmatpush.msra.mxu0 %v196
        %239 = vmatpush.msra.mxu0 %v194
        %240 = vmatpush.msra.mxu0 %v192
        %241 = vmatpush.msra.mxu0 %v190
        %242 = vmatpush.msra.mxu0 %v188
        %243 = vmatpush.msra.mxu0 %v186
        %244 = vmatpush.msra.mxu0 %v184
        %245 = vmatpush.msra.mxu0 %v182
        %246 = vmatpush.msra.mxu0 %v180
        %247 = vmatmul.f32.gmra.mxu0 %v178
        %v248 = vpop.f32.mrf.mxu0
        %v249 = vadd.f32 0.0, %v248
        %250 = vdwg.mxu0
        %251 = vst [vmem:[%s177] sm:$0xff] %v229
        %252 = vst [vmem:[%s177 + $0x8] sm:$0xff] %v249
        %s253 = sand.u32 %s75, 1
        %s254 = scalar_lea.sflag [#allocation4], %s253
        %s255 = sand.u32 %s75, 1
        %s256 = smul.addr %s255, 16
        %s257 = scalar_lea.vmem [#allocation7], %s256
        // Predicated region
        $region37: #{tpu_custom_call.1} parent=27 // pred_check
          %p258 = pneg %p85
        $region38: #{tpu_custom_call.1} parent=27 // pred_check_branch
          %260 = sbr.rel (%p258) target = $region40
        $region39: #{tpu_custom_call.1} parent=27 // pred_region
          %262 = vsyncadd %s254, 0
          %s263 = smul.addr %s20, 2
          %s264 = smul.addr %s263, 8
          %s265 = scalar_lea.hbm %s2, %s264
          %s267 = sshll.u32 %s257, 4
          %s268 = int_to_ptr.vmem [resolvable:$true] %s267
          %s269 = sshll.u32 %s265, 4
          %s270 = int_to_ptr.hbm [resolvable:$true] %s269
          %272 = dma.vmem_to_hbm [thread:$0]  %s268, 256, %s270, %s254
        $region40: #{tpu_custom_call.1} parent=27 // pred_fallthru
          _
      $region28: #{tpu_custom_call.1} parent=5 // pred_fallthru
        _
      %p273 = scmp.le.s32.totalorder 2, %s15
      // Predicated region
      $region41: #{tpu_custom_call.1} parent=5 // pred_check
        %p274 = pneg %p273
      $region42: #{tpu_custom_call.1} parent=5 // pred_check_branch
        %276 = sbr.rel (%p274) target = $region44
      $region43: #{tpu_custom_call.1} parent=5 // pred_region
        %s277 = ssub.s32 %s15, 2
        // Predicated region
        $region45: #{tpu_custom_call.1} parent=43 // pred_check
          %p278 = pneg %p91
        $region46: #{tpu_custom_call.1} parent=43 // pred_check_branch
          %280 = sbr.rel (%p278) target = $region48
        $region47: #{tpu_custom_call.1} parent=43 // pred_region
          %s281 = sand.u32 %s76, 1
          %s282 = scalar_lea.sflag [#allocation4], %s281
          %s283 = sand.u32 %s76, 1
          %s284 = smul.addr %s283, 16
          %s285 = scalar_lea.vmem [#allocation7], %s284
          %287 = dma.done %s282, 256
        $region48: #{tpu_custom_call.1} parent=43 // pred_fallthru
          _
      $region44: #{tpu_custom_call.1} parent=5 // pred_fallthru
        _
    $region6: #{tpu_custom_call.1} parent=1 // loop_footer
      %s19 = sadd.s32 1, %s15
    $region7: #{tpu_custom_call.1} parent=1 // loop_footer_branch
      %14 = sbr.rel target = $region3
    $region8: #{tpu_custom_call.1} parent=1 // loop_exit
      _
    %288 = vsyncpa [#allocation3], 1
    %s289 = scalar_lea.sflag [#allocation3], 1
    %290 = vsyncpa %s289, 1
    %291 = vsyncpa [#allocation6], 1
    %292 = vsyncpa [#allocation4], 1
    %s293 = scalar_lea.sflag [#allocation4], 1
    %294 = vsyncpa %s293, 1

</llo_original>
